<compile_context>
chip_gen: v7x
topology: tpu7x:2x2x1
jax: 0.10.0
libtpu: 0.0.40
codegen_flags: <defaults>
</compile_context>

<pallas_src>
import functools

import jax
import jax.numpy as jnp
import numpy as np
from jax import lax
from jax.experimental import pallas as pl


# ----------------------------------------------------------------------------
# Fused forward kernel: single invocation, whole batch.
# Layouts (prepared by the wrapper):
#   xcol: (B*L, K1*Cin)  im2col of the input (zero padding already applied)
#   w1:   (K1*Cin, F0) bf16, BN folded;   b1: (1, F0) f32 (BN folded)
#   w2:   (K2*F0, F1) bf16;               b2: (1, F1) f32
#   wf1:  (F1, H) bf16;  bf1: (1, H) f32
#   wf2:  (H, CPAD) bf16 (zero-padded lanes);  bf2: (1, CPAD) f32
#   out:  (B, CPAD) f32
# ----------------------------------------------------------------------------
def densecnn_kernel(xcol_ref, w1_ref, b1_ref, w2_ref, b2_ref,
                    wf1_ref, bf1_ref, wf2_ref, bf2_ref, o_ref, *, B, L):
    # ---- initial_conv (BN folded) + ReLU as ONE im2col matmul over the whole batch ----
    xcol = xcol_ref[...].astype(jnp.bfloat16)                   # (B*L, K1*Cin)
    h = jnp.dot(xcol, w1_ref[...], preferred_element_type=jnp.float32) + b1_ref[...]
    h = jnp.maximum(h, 0.0)                                     # (B*L, F0)

    # ---- dense1 conv (k=3, pad=1) with the global average pool commuted through it ----
    # mean_t conv2(h)[t] = b2 + (1/L) * [sum_t h[t+k-1]]_k @ w2_flat  (zero-padded edges):
    #   k=0 tap sum = S - h[last],  k=1 tap sum = S,  k=2 tap sum = S - h[first]
    rows = []
    for b in range(B):                                          # B=2, unrolled, static slices
        hb = h[b * L:(b + 1) * L, :]                            # (L, F0)
        s = jnp.sum(hb, axis=0, keepdims=True)                  # (1, F0)  (XLU reduction)
        m0 = s - hb[L - 1:L, :]
        m2 = s - hb[0:1, :]
        rows.append(jnp.concatenate([m0, s, m2], axis=1))       # (1, K2*F0)
    taps = jnp.concatenate(rows, axis=0) * (1.0 / L)            # (B, K2*F0)

    pooled = jnp.dot(taps.astype(jnp.bfloat16), w2_ref[...],
                     preferred_element_type=jnp.float32) + b2_ref[...]   # (B, F1)

    # ---- classifier: Linear(F1,128) -> ReLU -> (Dropout no-op) -> Linear(128,C) ----
    z = jnp.dot(pooled.astype(jnp.bfloat16), wf1_ref[...],
                preferred_element_type=jnp.float32) + bf1_ref[...]
    z = jnp.maximum(z, 0.0)
    out = jnp.dot(z.astype(jnp.bfloat16), wf2_ref[...],
                  preferred_element_type=jnp.float32) + bf2_ref[...]     # (B, CPAD)
    o_ref[...] = out.astype(o_ref.dtype)                        # lane-dense unmasked store


# ----------------------------------------------------------------------------
# Wrapper: BN fold, im2col, weight re-layout / bf16 casts (all tiny, fold under jit),
# single-step pallas_call, slice the padded class lanes back to C.
# ----------------------------------------------------------------------------
def densecnn_forward(params, x):
    (w1, b1, gamma, beta, rmean, rvar, w2, b2, wf1, bf1, wf2, bf2) = params
    B, L, Cin = x.shape
    F0, _, K1 = w1.shape
    F1, _, K2 = w2.shape
    C = wf2.shape[0]
    H = wf1.shape[0]
    eps = 1e-5
    CPAD = 128 * pl.cdiv(C, 128)                                # lane-dense output width

    # Fold eval-mode BatchNorm1d into conv1 (per output channel scale/shift).
    scale = gamma / jnp.sqrt(rvar + eps)
    shift = beta - rmean * scale
    w1_eff = w1 * scale[:, None, None]                          # (F0, Cin, K1)
    b1_eff = (b1 * scale + shift).reshape(1, F0)

    # conv1 as one im2col matmul: xcol[b,t, k*Cin+c] = x[b, t+k-p1, c] (0 outside).
    p1 = (K1 - 1) // 2
    xp = jnp.pad(x, ((0, 0), (p1, p1), (0, 0)))                 # (B, L+K1-1, Cin)
    xcol = jnp.concatenate([xp[:, k:k + L, :] for k in range(K1)], axis=2)
    xcol = xcol.reshape(B * L, K1 * Cin)                        # (B*L, K1*Cin)
    w1_flat = jnp.transpose(w1_eff, (2, 1, 0)).reshape(K1 * Cin, F0).astype(jnp.bfloat16)

    # conv2 taps flattened (pool is commuted through conv2 inside the kernel).
    w2_flat = jnp.transpose(w2, (2, 1, 0)).reshape(K2 * F0, F1).astype(jnp.bfloat16)
    b2_r = b2.reshape(1, F1)

    wf1_t = wf1.T.astype(jnp.bfloat16)                          # (F1, H)
    bf1_r = bf1.reshape(1, H)
    wf2_t = jnp.pad(wf2.T, ((0, 0), (0, CPAD - C))).astype(jnp.bfloat16)   # (H, CPAD)
    bf2_r = jnp.pad(bf2.reshape(1, C), ((0, 0), (0, CPAD - C)))

    kern = functools.partial(densecnn_kernel, B=B, L=L)

    out = pl.pallas_call(
        kern,
        grid=(1,),                                              # single step, whole batch
        in_specs=[
            pl.BlockSpec((B * L, K1 * Cin), lambda i: (0, 0)),
            pl.BlockSpec((K1 * Cin, F0), lambda i: (0, 0)),
            pl.BlockSpec((1, F0), lambda i: (0, 0)),
            pl.BlockSpec((K2 * F0, F1), lambda i: (0, 0)),
            pl.BlockSpec((1, F1), lambda i: (0, 0)),
            pl.BlockSpec((F1, H), lambda i: (0, 0)),
            pl.BlockSpec((1, H), lambda i: (0, 0)),
            pl.BlockSpec((H, CPAD), lambda i: (0, 0)),
            pl.BlockSpec((1, CPAD), lambda i: (0, 0)),
        ],
        out_specs=pl.BlockSpec((B, CPAD), lambda i: (0, 0)),
        out_shape=jax.ShapeDtypeStruct((B, CPAD), jnp.float32),
    )(xcol, w1_flat, b1_eff, w2_flat, b2_r, wf1_t, bf1_r, wf2_t, bf2_r)
    return out[:, :C]


# ----------------------------------------------------------------------------
# Pure-JAX reference (unfused, explicit BN, f32) for correctness checking.
# ----------------------------------------------------------------------------
def model_ref(params, x):
    (w1, b1, gamma, beta, rmean, rvar, w2, b2, wf1, bf1, wf2, bf2) = params
    eps = 1e-5
    u = jnp.transpose(x, (0, 2, 1))                             # (B, Cin, L) — x.transpose(1, 2)
    u = lax.conv_general_dilated(u, w1, (1,), [(2, 2)],
                                 dimension_numbers=("NCH", "OIH", "NCH"))
    u = u + b1[None, :, None]
    u = (u - rmean[None, :, None]) / jnp.sqrt(rvar[None, :, None] + eps)
    u = u * gamma[None, :, None] + beta[None, :, None]          # BatchNorm1d (eval)
    u = jnp.maximum(u, 0.0)                                     # ReLU
    u = lax.conv_general_dilated(u, w2, (1,), [(1, 1)],
                                 dimension_numbers=("NCH", "OIH", "NCH"))
    u = u + b2[None, :, None]
    p = jnp.mean(u, axis=2)                                     # AdaptiveAvgPool1d(1) + Flatten
    z = jnp.maximum(p @ wf1.T + bf1, 0.0)
    return z @ wf2.T + bf2


# ----------------------------------------------------------------------------
# Deterministic parameter init (PyTorch layouts, PyTorch-style uniform bounds).
# ----------------------------------------------------------------------------
def init_params(key, Cin, F0, C):
    F1 = 2 * F0
    ks = jax.random.split(key, 12)

    def u(k, shape, bound):
        return jax.random.uniform(k, shape, jnp.float32, -bound, bound)

    bc1 = 1.0 / np.sqrt(Cin * 5)
    bc2 = 1.0 / np.sqrt(F0 * 3)
    bl1 = 1.0 / np.sqrt(F1)
    bl2 = 1.0 / np.sqrt(128)
    w1 = u(ks[0], (F0, Cin, 5), bc1)
    b1 = u(ks[1], (F0,), bc1)
    gamma = jax.random.uniform(ks[2], (F0,), jnp.float32, 0.5, 1.5)
    beta = u(ks[3], (F0,), 0.5)
    rmean = u(ks[4], (F0,), 0.5)
    rvar = jax.random.uniform(ks[5], (F0,), jnp.float32, 0.5, 1.5)
    w2 = u(ks[6], (F1, F0, 3), bc2)
    b2 = u(ks[7], (F1,), bc2)
    wf1 = u(ks[8], (128, F1), bl1)
    bf1 = u(ks[9], (128,), bl1)
    wf2 = u(ks[10], (C, 128), bl2)
    bf2 = u(ks[11], (C,), bl2)
    return (w1, b1, gamma, beta, rmean, rvar, w2, b2, wf1, bf1, wf2, bf2)


if __name__ == "__main__":
    # data_shape = (seq_len=16, num_nodes=4), initialFilters=64 (-> 128 dense1 channels),
    # num_classes=5, batch=2.
    B, L, N = 2, 16, 4
    F0, C = 64, 5

    key = jax.random.PRNGKey(0)
    kp, kx = jax.random.split(key)
    params = init_params(kp, N, F0, C)
    x = jax.random.normal(kx, (B, L, N), jnp.float32)           # (batch, seq_len, num_nodes)

    fwd = jax.jit(densecnn_forward)
    out = fwd(params, x)
    out = jax.block_until_ready(out)

    ref = model_ref(params, x)
    # Kernel uses bf16 MXU operands (f32 accumulation); compare against the f32 reference
    # with a tolerance that covers bf16 operand rounding.
    np.testing.assert_allclose(np.asarray(out), np.asarray(ref), rtol=2e-2, atol=1e-2)
    assert out.shape == (B, C)
    print("KERNEL_OK")
</pallas_src>

<mosaic_0001>
module attributes {stable_mosaic.version = 11 : i64} {
  func.func @densecnn_kernel(%arg0: i32, %arg1: memref<32x20xf32, #tpu.memory_space<vmem>>, %arg2: memref<20x64xbf16, #tpu.memory_space<vmem>>, %arg3: memref<1x64xf32, #tpu.memory_space<vmem>>, %arg4: memref<192x128xbf16, #tpu.memory_space<vmem>>, %arg5: memref<1x128xf32, #tpu.memory_space<vmem>>, %arg6: memref<128x128xbf16, #tpu.memory_space<vmem>>, %arg7: memref<1x128xf32, #tpu.memory_space<vmem>>, %arg8: memref<128x128xbf16, #tpu.memory_space<vmem>>, %arg9: memref<1x128xf32, #tpu.memory_space<vmem>>, %arg10: memref<2x128xf32, #tpu.memory_space<vmem>>) attributes {dimension_semantics = [#tpu.dimension_semantics<arbitrary>], iteration_bounds = array<i64: 1>, scalar_prefetch = 0 : i64, scratch_operands = 0 : i64, tpu.core_type = #tpu.core_type<tc>, window_params = [{pipeline_mode = #tpu.pipeline_mode<synchronous>, transform_indices = @transform_0, window_bounds = array<i64: 32, 20>}, {pipeline_mode = #tpu.pipeline_mode<synchronous>, transform_indices = @transform_1, window_bounds = array<i64: 20, 64>}, {pipeline_mode = #tpu.pipeline_mode<synchronous>, transform_indices = @transform_2, window_bounds = array<i64: 1, 64>}, {pipeline_mode = #tpu.pipeline_mode<synchronous>, transform_indices = @transform_3, window_bounds = array<i64: 192, 128>}, {pipeline_mode = #tpu.pipeline_mode<synchronous>, transform_indices = @transform_4, window_bounds = array<i64: 1, 128>}, {pipeline_mode = #tpu.pipeline_mode<synchronous>, transform_indices = @transform_5, window_bounds = array<i64: 128, 128>}, {pipeline_mode = #tpu.pipeline_mode<synchronous>, transform_indices = @transform_6, window_bounds = array<i64: 1, 128>}, {pipeline_mode = #tpu.pipeline_mode<synchronous>, transform_indices = @transform_7, window_bounds = array<i64: 128, 128>}, {pipeline_mode = #tpu.pipeline_mode<synchronous>, transform_indices = @transform_8, window_bounds = array<i64: 1, 128>}, {pipeline_mode = #tpu.pipeline_mode<synchronous>, transform_indices = @transform_9, window_bounds = array<i64: 2, 128>}]} {
    %c0 = arith.constant 0 : index
    %c0_0 = arith.constant 0 : index
    %0 = vector.load %arg1[%c0, %c0_0] : memref<32x20xf32, #tpu.memory_space<vmem>>, vector<32x20xf32>
    %1 = arith.truncf %0 : vector<32x20xf32> to vector<32x20xbf16>
    %c0_1 = arith.constant 0 : index
    %c0_2 = arith.constant 0 : index
    %2 = vector.load %arg2[%c0_1, %c0_2] : memref<20x64xbf16, #tpu.memory_space<vmem>>, vector<20x64xbf16>
    %cst = arith.constant dense<0.000000e+00> : vector<32x64xf32>
    %3 = tpu.matmul %1, %2, %cst {dimension_numbers = #tpu.dot_dimension_numbers<[1], [0], [0], [1], [0, 0, 1, 1], [], []>} : vector<32x20xbf16>, vector<20x64xbf16>, vector<32x64xf32> -> vector<32x64xf32>
    %c0_3 = arith.constant 0 : index
    %c0_4 = arith.constant 0 : index
    %4 = vector.load %arg3[%c0_3, %c0_4] : memref<1x64xf32, #tpu.memory_space<vmem>>, vector<1x64xf32>
    %5 = vector.broadcast %4 : vector<1x64xf32> to vector<32x64xf32>
    %6 = arith.addf %3, %5 : vector<32x64xf32>
    %cst_5 = arith.constant 0.000000e+00 : f32
    %7 = vector.broadcast %cst_5 : f32 to vector<32x64xf32>
    %8 = arith.maximumf %6, %7 : vector<32x64xf32>
    %9 = vector.extract_strided_slice %8 {offsets = [0, 0], sizes = [16, 64], strides = [1, 1]} : vector<32x64xf32> to vector<16x64xf32>
    %cst_6 = arith.constant dense<0.000000e+00> : vector<64xf32>
    %10 = vector.multi_reduction <add>, %9, %cst_6 [0] : vector<16x64xf32> to vector<64xf32>
    %11 = vector.shape_cast %10 : vector<64xf32> to vector<1x64xf32>
    %12 = vector.extract_strided_slice %9 {offsets = [15, 0], sizes = [1, 64], strides = [1, 1]} : vector<16x64xf32> to vector<1x64xf32>
    %13 = arith.subf %11, %12 : vector<1x64xf32>
    %14 = vector.extract_strided_slice %9 {offsets = [0, 0], sizes = [1, 64], strides = [1, 1]} : vector<16x64xf32> to vector<1x64xf32>
    %15 = arith.subf %11, %14 : vector<1x64xf32>
    %16 = tpu.concatenate %13, %11, %15 in 1 : vector<1x64xf32>, vector<1x64xf32>, vector<1x64xf32> -> vector<1x192xf32>
    %17 = vector.extract_strided_slice %8 {offsets = [16, 0], sizes = [16, 64], strides = [1, 1]} : vector<32x64xf32> to vector<16x64xf32>
    %cst_7 = arith.constant dense<0.000000e+00> : vector<64xf32>
    %18 = vector.multi_reduction <add>, %17, %cst_7 [0] : vector<16x64xf32> to vector<64xf32>
    %19 = vector.shape_cast %18 : vector<64xf32> to vector<1x64xf32>
    %20 = vector.extract_strided_slice %17 {offsets = [15, 0], sizes = [1, 64], strides = [1, 1]} : vector<16x64xf32> to vector<1x64xf32>
    %21 = arith.subf %19, %20 : vector<1x64xf32>
    %22 = vector.extract_strided_slice %17 {offsets = [0, 0], sizes = [1, 64], strides = [1, 1]} : vector<16x64xf32> to vector<1x64xf32>
    %23 = arith.subf %19, %22 : vector<1x64xf32>
    %24 = tpu.concatenate %21, %19, %23 in 1 : vector<1x64xf32>, vector<1x64xf32>, vector<1x64xf32> -> vector<1x192xf32>
    %25 = tpu.concatenate %16, %24 in 0 : vector<1x192xf32>, vector<1x192xf32> -> vector<2x192xf32>
    %cst_8 = arith.constant 6.250000e-02 : f32
    %26 = vector.broadcast %cst_8 : f32 to vector<2x192xf32>
    %27 = arith.mulf %25, %26 : vector<2x192xf32>
    %28 = arith.truncf %27 : vector<2x192xf32> to vector<2x192xbf16>
    %c0_9 = arith.constant 0 : index
    %c0_10 = arith.constant 0 : index
    %29 = vector.load %arg4[%c0_9, %c0_10] : memref<192x128xbf16, #tpu.memory_space<vmem>>, vector<192x128xbf16>
    %cst_11 = arith.constant dense<0.000000e+00> : vector<2x128xf32>
    %30 = tpu.matmul %28, %29, %cst_11 {dimension_numbers = #tpu.dot_dimension_numbers<[1], [0], [0], [1], [0, 0, 1, 1], [], []>} : vector<2x192xbf16>, vector<192x128xbf16>, vector<2x128xf32> -> vector<2x128xf32>
    %c0_12 = arith.constant 0 : index
    %c0_13 = arith.constant 0 : index
    %31 = vector.load %arg5[%c0_12, %c0_13] : memref<1x128xf32, #tpu.memory_space<vmem>>, vector<1x128xf32>
    %32 = vector.broadcast %31 : vector<1x128xf32> to vector<2x128xf32>
    %33 = arith.addf %30, %32 : vector<2x128xf32>
    %34 = arith.truncf %33 : vector<2x128xf32> to vector<2x128xbf16>
    %c0_14 = arith.constant 0 : index
    %c0_15 = arith.constant 0 : index
    %35 = vector.load %arg6[%c0_14, %c0_15] : memref<128x128xbf16, #tpu.memory_space<vmem>>, vector<128x128xbf16>
    %cst_16 = arith.constant dense<0.000000e+00> : vector<2x128xf32>
    %36 = tpu.matmul %34, %35, %cst_16 {dimension_numbers = #tpu.dot_dimension_numbers<[1], [0], [0], [1], [0, 0, 1, 1], [], []>} : vector<2x128xbf16>, vector<128x128xbf16>, vector<2x128xf32> -> vector<2x128xf32>
    %c0_17 = arith.constant 0 : index
    %c0_18 = arith.constant 0 : index
    %37 = vector.load %arg7[%c0_17, %c0_18] : memref<1x128xf32, #tpu.memory_space<vmem>>, vector<1x128xf32>
    %38 = vector.broadcast %37 : vector<1x128xf32> to vector<2x128xf32>
    %39 = arith.addf %36, %38 : vector<2x128xf32>
    %cst_19 = arith.constant 0.000000e+00 : f32
    %40 = vector.broadcast %cst_19 : f32 to vector<2x128xf32>
    %41 = arith.maximumf %39, %40 : vector<2x128xf32>
    %42 = arith.truncf %41 : vector<2x128xf32> to vector<2x128xbf16>
    %c0_20 = arith.constant 0 : index
    %c0_21 = arith.constant 0 : index
    %43 = vector.load %arg8[%c0_20, %c0_21] : memref<128x128xbf16, #tpu.memory_space<vmem>>, vector<128x128xbf16>
    %cst_22 = arith.constant dense<0.000000e+00> : vector<2x128xf32>
    %44 = tpu.matmul %42, %43, %cst_22 {dimension_numbers = #tpu.dot_dimension_numbers<[1], [0], [0], [1], [0, 0, 1, 1], [], []>} : vector<2x128xbf16>, vector<128x128xbf16>, vector<2x128xf32> -> vector<2x128xf32>
    %c0_23 = arith.constant 0 : index
    %c0_24 = arith.constant 0 : index
    %45 = vector.load %arg9[%c0_23, %c0_24] : memref<1x128xf32, #tpu.memory_space<vmem>>, vector<1x128xf32>
    %46 = vector.broadcast %45 : vector<1x128xf32> to vector<2x128xf32>
    %47 = arith.addf %44, %46 : vector<2x128xf32>
    %c0_25 = arith.constant 0 : index
    %c0_26 = arith.constant 0 : index
    %48 = vector.load %arg10[%c0_25, %c0_26] : memref<2x128xf32, #tpu.memory_space<vmem>>, vector<2x128xf32>
    tpu.vector_store %arg10[%c0_25, %c0_26], %47 {strides = array<i32>} : memref<2x128xf32, #tpu.memory_space<vmem>>, vector<2x128xf32>,
    return
  }
  func.func @transform_0(%arg0: i32) -> (i32, i32) {
    %c0_i32 = arith.constant 0 : i32
    %c0_i32_0 = arith.constant 0 : i32
    %c0_i32_1 = arith.constant 0 : i32
    return %c0_i32, %c0_i32_0 : i32, i32
  }
  func.func @transform_1(%arg0: i32) -> (i32, i32) {
    %c0_i32 = arith.constant 0 : i32
    %c0_i32_0 = arith.constant 0 : i32
    %c0_i32_1 = arith.constant 0 : i32
    return %c0_i32, %c0_i32_0 : i32, i32
  }
  func.func @transform_2(%arg0: i32) -> (i32, i32) {
    %c0_i32 = arith.constant 0 : i32
    %c0_i32_0 = arith.constant 0 : i32
    %c0_i32_1 = arith.constant 0 : i32
    return %c0_i32, %c0_i32_0 : i32, i32
  }
  func.func @transform_3(%arg0: i32) -> (i32, i32) {
    %c0_i32 = arith.constant 0 : i32
    %c0_i32_0 = arith.constant 0 : i32
    %c0_i32_1 = arith.constant 0 : i32
    return %c0_i32, %c0_i32_0 : i32, i32
  }
  func.func @transform_4(%arg0: i32) -> (i32, i32) {
    %c0_i32 = arith.constant 0 : i32
    %c0_i32_0 = arith.constant 0 : i32
    %c0_i32_1 = arith.constant 0 : i32
    return %c0_i32, %c0_i32_0 : i32, i32
  }
  func.func @transform_5(%arg0: i32) -> (i32, i32) {
    %c0_i32 = arith.constant 0 : i32
    %c0_i32_0 = arith.constant 0 : i32
    %c0_i32_1 = arith.constant 0 : i32
    return %c0_i32, %c0_i32_0 : i32, i32
  }
  func.func @transform_6(%arg0: i32) -> (i32, i32) {
    %c0_i32 = arith.constant 0 : i32
    %c0_i32_0 = arith.constant 0 : i32
    %c0_i32_1 = arith.constant 0 : i32
    return %c0_i32, %c0_i32_0 : i32, i32
  }
  func.func @transform_7(%arg0: i32) -> (i32, i32) {
    %c0_i32 = arith.constant 0 : i32
    %c0_i32_0 = arith.constant 0 : i32
    %c0_i32_1 = arith.constant 0 : i32
    return %c0_i32, %c0_i32_0 : i32, i32
  }
  func.func @transform_8(%arg0: i32) -> (i32, i32) {
    %c0_i32 = arith.constant 0 : i32
    %c0_i32_0 = arith.constant 0 : i32
    %c0_i32_1 = arith.constant 0 : i32
    return %c0_i32, %c0_i32_0 : i32, i32
  }
  func.func @transform_9(%arg0: i32) -> (i32, i32) {
    %c0_i32 = arith.constant 0 : i32
    %c0_i32_0 = arith.constant 0 : i32
    %c0_i32_1 = arith.constant 0 : i32
    return %c0_i32, %c0_i32_0 : i32, i32
  }
}

</mosaic_0001>

<llo_original>
// kernel: densecnn_forward.1
$region0: #{densecnn_forward.1}
  #allocation0 [shape = 'u32[]', space=smem, size = 0x4, offset = 0x4, fixed_abs, tag = 'smem constant byte address 0x4 - core index']
  #allocation1 [shape = 'u32[144,128]{1,0:T(1,128)}', space=vmem, size = 0x12000, scoped, tag = 'internal scratch']
  %s0 = inlined_call_operand.vmem [shape: f32[32,20], index: 0, kind: input, shape index: {}]
  %s1 = inlined_call_operand.vmem [shape: bf16[20,64], index: 1, kind: input, shape index: {}]
  %s2 = inlined_call_operand.vmem [shape: f32[1,64], index: 2, kind: input, shape index: {}]
  %s3 = inlined_call_operand.vmem [shape: bf16[192,128], index: 3, kind: input, shape index: {}]
  %s4 = inlined_call_operand.vmem [shape: f32[1,128], index: 4, kind: input, shape index: {}]
  %s5 = inlined_call_operand.vmem [shape: bf16[128,128], index: 5, kind: input, shape index: {}]
  %s6 = inlined_call_operand.vmem [shape: f32[1,128], index: 6, kind: input, shape index: {}]
  %s7 = inlined_call_operand.vmem [shape: bf16[128,128], index: 7, kind: input, shape index: {}]
  %s8 = inlined_call_operand.vmem [shape: f32[1,128], index: 8, kind: input, shape index: {}]
  %s9 = inlined_call_operand.hbm [shape: f32[2,128], index: 9, kind: output, shape index: {}]
  %s10 = sld [smem:[#allocation0]]
  $region46: #{densecnn_forward.1} parent=0
    _
  %s12 = ssub.s32 1, %s10
  %s13 = scalar_select 0, %s12, %s10
  $region1: #{densecnn_forward.1} parent=0
    #allocation2 [shape = 'u8[1024]{0}', space=vmem, size = 0x400, scoped, tag = 'output window, operand 0, single buffered']
    #allocation3 [shape = 's32[1]{0}', space=sflag, size = 0x4, scoped, tag = 'scoped memory for densecnn_forward.1']
    %14 = vsyncpa [#allocation3], 0
    // Predicated region
    $region2: #{densecnn_forward.1} parent=1 // pred_check
      _
    $region3: #{densecnn_forward.1} parent=1 // pred_check_branch
      %16 = sbr.rel (0) target = $region5
    $region4: #{densecnn_forward.1} parent=1 // pred_region
      _
    $region5: #{densecnn_forward.1} parent=1 // pred_fallthru
      _
    // Predicated region
    $region6: #{densecnn_forward.1} parent=1 // pred_check
      _
    $region7: #{densecnn_forward.1} parent=1 // pred_check_branch
      %18 = sbr.rel (0) target = $region9
    $region8: #{densecnn_forward.1} parent=1 // pred_region
      _
    $region9: #{densecnn_forward.1} parent=1 // pred_fallthru
      _
    // Predicated region
    $region10: #{densecnn_forward.1} parent=1 // pred_check
      _
    $region11: #{densecnn_forward.1} parent=1 // pred_check_branch
      %20 = sbr.rel (0) target = $region13
    $region12: #{densecnn_forward.1} parent=1 // pred_region
      _
    $region13: #{densecnn_forward.1} parent=1 // pred_fallthru
      _
    // Predicated region
    $region14: #{densecnn_forward.1} parent=1 // pred_check
      _
    $region15: #{densecnn_forward.1} parent=1 // pred_check_branch
      %22 = sbr.rel (0) target = $region17
    $region16: #{densecnn_forward.1} parent=1 // pred_region
      _
    $region17: #{densecnn_forward.1} parent=1 // pred_fallthru
      _
    // Predicated region
    $region18: #{densecnn_forward.1} parent=1 // pred_check
      _
    $region19: #{densecnn_forward.1} parent=1 // pred_check_branch
      %24 = sbr.rel (0) target = $region21
    $region20: #{densecnn_forward.1} parent=1 // pred_region
      _
    $region21: #{densecnn_forward.1} parent=1 // pred_fallthru
      _
    // Predicated region
    $region22: #{densecnn_forward.1} parent=1 // pred_check
      _
    $region23: #{densecnn_forward.1} parent=1 // pred_check_branch
      %26 = sbr.rel (0) target = $region25
    $region24: #{densecnn_forward.1} parent=1 // pred_region
      _
    $region25: #{densecnn_forward.1} parent=1 // pred_fallthru
      _
    // Predicated region
    $region26: #{densecnn_forward.1} parent=1 // pred_check
      _
    $region27: #{densecnn_forward.1} parent=1 // pred_check_branch
      %28 = sbr.rel (0) target = $region29
    $region28: #{densecnn_forward.1} parent=1 // pred_region
      _
    $region29: #{densecnn_forward.1} parent=1 // pred_fallthru
      _
    // Predicated region
    $region30: #{densecnn_forward.1} parent=1 // pred_check
      _
    $region31: #{densecnn_forward.1} parent=1 // pred_check_branch
      %30 = sbr.rel (0) target = $region33
    $region32: #{densecnn_forward.1} parent=1 // pred_region
      _
    $region33: #{densecnn_forward.1} parent=1 // pred_fallthru
      _
    // Predicated region
    $region34: #{densecnn_forward.1} parent=1 // pred_check
      _
    $region35: #{densecnn_forward.1} parent=1 // pred_check_branch
      %32 = sbr.rel (0) target = $region37
    $region36: #{densecnn_forward.1} parent=1 // pred_region
      _
    $region37: #{densecnn_forward.1} parent=1 // pred_fallthru
      _
    %v34 = vld [vmem:[%s0] sm:$0xff]
    %v35 = vld [vmem:[%s0 + $0x8] sm:$0xff]
    %v36 = vld [vmem:[%s0 + $0x10] sm:$0xff]
    %v37 = vld [vmem:[%s0 + $0x18] sm:$0xff]
    %v38 = vpack.c.bf16 %v35, %v34
    %v39 = vpack.c.bf16 %v37, %v36
    %v40 = vld [vmem:[%s1] sm:$0xf]
    %v41 = vld [vmem:[%s1 + $0x4] sm:$0xf]
    %v42 = vld [vmem:[%s1 + $0x8] sm:$0x3]
    %v43 = vld [vmem:[%s2] sm:$0x1]
    %v45 = vlaneseq
    %v46 = vshrl.u32 %v45, 7
    %v47 = vsub.s32 0, %v46
    %v48 = vrot.slane %v43, %v47
    %v53 = vunpack.c.l.b16 %v40
    %v54 = vunpack.c.l.b16 %v41
    %v55 = vunpack.c.l.b16 %v42
    %v56 = vpack.c.b16 %v54, %v53
    %v57 = vpack.c.b16 %v55, %v55
    %vm59 = vcmask 162816
    %v61 = vsel %vm59, %v38, 0
    %v64 = vsel %vm59, %v39, 0
    %vm66 = vcmask 1041408
    %v68 = vsel %vm66, %v57, 0
    %70 = vmatprep.subr.bf16.mxu0 0
    %71 = vmatpush1.bf16.msra.mxu0 %v56
    %72 = vmatprep.subr.bf16.mxu0 0
    %73 = vmatpush1.bf16.msra.mxu0 %v68
    %74 = vmatprep.subr.bf16.mxu0 0
    %75 = vmatpush1.bf16.msra.mxu0 0
    %76 = vmatprep.subr.bf16.mxu0 0
    %77 = vmatpush1.bf16.msra.mxu0 0
    %78 = vmatprep.subr.bf16.mxu0 0
    %79 = vmatpush1.bf16.msra.mxu0 0
    %80 = vmatprep.subr.bf16.mxu0 0
    %81 = vmatpush1.bf16.msra.mxu0 0
    %82 = vmatprep.subr.bf16.mxu0 0
    %83 = vmatpush1.bf16.msra.mxu0 0
    %84 = vmatprep.subr.bf16.mxu0 0
    %85 = vmatpush1.bf16.msra.mxu0 0
    %86 = vmatprep.subr.bf16.mxu0 0
    %87 = vmatpush1.bf16.msra.mxu0 0
    %88 = vmatprep.subr.bf16.mxu0 0
    %89 = vmatpush1.bf16.msra.mxu0 0
    %90 = vmatprep.subr.bf16.mxu0 0
    %91 = vmatpush1.bf16.msra.mxu0 0
    %92 = vmatprep.subr.bf16.mxu0 0
    %93 = vmatpush1.bf16.msra.mxu0 0
    %94 = vmatprep.subr.bf16.mxu0 0
    %95 = vmatpush1.bf16.msra.mxu0 0
    %96 = vmatprep.subr.bf16.mxu0 0
    %97 = vmatpush1.bf16.msra.mxu0 0
    %98 = vmatprep.subr.bf16.mxu0 0
    %99 = vmatpush1.bf16.msra.mxu0 0
    %100 = vmatprep.subr.bf16.mxu0 0
    %101 = vmatpush1.bf16.msra.mxu0 0
    %102 = vmatprep.mubr.bf16.mxu0 0
    %103 = vmatmul.mubr.bf16.gmra.mrb[0].mxu0 %v61
    %v104 = vpop.f32.mrb[0].mxu0
    %v105 = vadd.f32 %v48, %v104
    %v106 = vpop.f32.mrb[0].mxu0
    %v107 = vpop.f32.mrb[0].mxu0
    %v108 = vadd.f32 %v48, %v107
    %v109 = vpop.f32.mrb[0].mxu0
    %110 = vmatprep.mubr.bf16.mxu0 0
    %111 = vmatmul.mubr.bf16.gmra.mrb[0].mxu0 %v64
    %v112 = vpop.f32.mrb[0].mxu0
    %v113 = vadd.f32 %v48, %v112
    %v114 = vpop.f32.mrb[0].mxu0
    %v115 = vpop.f32.mrb[0].mxu0
    %v116 = vadd.f32 %v48, %v115
    %v117 = vpop.f32.mrb[0].mxu0
    %118 = vdwg.mxu0
    %v119 = vmax.f32 %v105, 0.0
    %v120 = vmax.f32 %v108, 0.0
    %v121 = vmax.f32 %v113, 0.0
    %v122 = vmax.f32 %v116, 0.0
    %vm123 = vcmask 523264
    %v124 = vsel %vm123, %v119, 0.0
    %v125 = vsel %vm123, %v120, 0.0
    %v126 = vadd.f32 %v124, %v125
    %v127 = vrot.slane %v126, 4
    %v128 = vadd.f32 %v126, %v127
    %v129 = vrot.slane %v128, 2
    %v130 = vadd.f32 %v128, %v129
    %v131 = vrot.slane %v130, 1
    %v132 = vadd.f32 %v130, %v131
    %v133 = vsub.f32 %v132, %v120
    %v134 = vsub.f32 %v132, %v119
    %136 = vrot.lane.b32.xlu0 %v132, 64
    %v137 = vpop.permute.xlu0 %136
    %v140 = vrot.slane %v134, 1
    %v141 = vsel %vm123, %v133, %v137
    %v142 = vsel %vm123, %v121, 0.0
    %v143 = vsel %vm123, %v122, 0.0
    %v144 = vadd.f32 %v142, %v143
    %v145 = vrot.slane %v144, 4
    %v146 = vadd.f32 %v144, %v145
    %v147 = vrot.slane %v146, 2
    %v148 = vadd.f32 %v146, %v147
    %v149 = vrot.slane %v148, 1
    %v150 = vadd.f32 %v148, %v149
    %v151 = vsub.f32 %v150, %v122
    %v152 = vsub.f32 %v150, %v121
    %154 = vrot.lane.b32.xlu0 %v150, 64
    %v155 = vpop.permute.xlu0 %154
    %v158 = vrot.slane %v152, 1
    %v159 = vsel %vm123, %v151, %v155
    %v161 = vrot.slane %v141, 7
    %v162 = vrot.slane %v140, 7
    %v166 = vrot.slane %v159, 6
    %v167 = vrot.slane %v158, 6
    %vm170 = vcmask 1040384
    %v171 = vsel %vm170, %v161, %v166
    %v172 = vsel %vm170, %v162, %v167
    %v173 = vmul.f32 %v171, 0.0625
    %v174 = vmul.f32 %v172, 0.0625
    %v175 = vpack.c.bf16 %v173, %v173
    %v176 = vpack.c.bf16 %v174, %v174
    %v177 = vld [vmem:[%s3] sm:$0xf]
    %v178 = vld [vmem:[%s3 + $0x4] sm:$0xf]
    %v179 = vld [vmem:[%s3 + $0x8] sm:$0xf]
    %v180 = vld [vmem:[%s3 + $0xc] sm:$0xf]
    %v181 = vld [vmem:[%s3 + $0x10] sm:$0xf]
    %v182 = vld [vmem:[%s3 + $0x14] sm:$0xf]
    %v183 = vld [vmem:[%s3 + $0x18] sm:$0xf]
    %v184 = vld [vmem:[%s3 + $0x1c] sm:$0xf]
    %v185 = vld [vmem:[%s3 + $0x20] sm:$0xf]
    %v186 = vld [vmem:[%s3 + $0x24] sm:$0xf]
    %v187 = vld [vmem:[%s3 + $0x28] sm:$0xf]
    %v188 = vld [vmem:[%s3 + $0x2c] sm:$0xf]
    %v189 = vld [vmem:[%s3 + $0x30] sm:$0xf]
    %v190 = vld [vmem:[%s3 + $0x34] sm:$0xf]
    %v191 = vld [vmem:[%s3 + $0x38] sm:$0xf]
    %v192 = vld [vmem:[%s3 + $0x3c] sm:$0xf]
    %v193 = vld [vmem:[%s3 + $0x40] sm:$0xf]
    %v194 = vld [vmem:[%s3 + $0x44] sm:$0xf]
    %v195 = vld [vmem:[%s3 + $0x48] sm:$0xf]
    %v196 = vld [vmem:[%s3 + $0x4c] sm:$0xf]
    %v197 = vld [vmem:[%s3 + $0x50] sm:$0xf]
    %v198 = vld [vmem:[%s3 + $0x54] sm:$0xf]
    %v199 = vld [vmem:[%s3 + $0x58] sm:$0xf]
    %v200 = vld [vmem:[%s3 + $0x5c] sm:$0xf]
    %v201 = vld [vmem:[%s4] sm:$0x1]
    %v203 = vlaneseq
    %v204 = vshrl.u32 %v203, 7
    %v205 = vsub.s32 0, %v204
    %v206 = vrot.slane %v201, %v205
    %v232 = vunpack.c.l.b16 %v177
    %v233 = vunpack.c.l.b16 %v178
    %v234 = vunpack.c.l.b16 %v179
    %v235 = vunpack.c.l.b16 %v180
    %v236 = vunpack.c.l.b16 %v181
    %v237 = vunpack.c.l.b16 %v182
    %v238 = vunpack.c.l.b16 %v183
    %v239 = vunpack.c.l.b16 %v184
    %v240 = vunpack.c.l.b16 %v185
    %v241 = vunpack.c.l.b16 %v186
    %v242 = vunpack.c.l.b16 %v187
    %v243 = vunpack.c.l.b16 %v188
    %v244 = vunpack.c.l.b16 %v189
    %v245 = vunpack.c.l.b16 %v190
    %v246 = vunpack.c.l.b16 %v191
    %v247 = vunpack.c.l.b16 %v192
    %v248 = vunpack.c.l.b16 %v193
    %v249 = vunpack.c.l.b16 %v194
    %v250 = vunpack.c.l.b16 %v195
    %v251 = vunpack.c.l.b16 %v196
    %v252 = vunpack.c.l.b16 %v197
    %v253 = vunpack.c.l.b16 %v198
    %v254 = vunpack.c.l.b16 %v199
    %v255 = vunpack.c.l.b16 %v200
    %v256 = vpack.c.b16 %v233, %v232
    %v257 = vpack.c.b16 %v235, %v234
    %v258 = vpack.c.b16 %v237, %v236
    %v259 = vpack.c.b16 %v239, %v238
    %v260 = vpack.c.b16 %v241, %v240
    %v261 = vpack.c.b16 %v243, %v242
    %v262 = vpack.c.b16 %v245, %v244
    %v263 = vpack.c.b16 %v247, %v246
    %v264 = vpack.c.b16 %v249, %v248
    %v265 = vpack.c.b16 %v251, %v250
    %v266 = vpack.c.b16 %v253, %v252
    %v267 = vpack.c.b16 %v255, %v254
    %v281 = vsel %vm123, %v176, 0
    %283 = vmatprep.subr.bf16.mxu0 0
    %284 = vmatpush1.bf16.msra.mxu0 %v256
    %285 = vmatprep.subr.bf16.mxu0 0
    %286 = vmatpush1.bf16.msra.mxu0 %v257
    %287 = vmatprep.subr.bf16.mxu0 0
    %288 = vmatpush1.bf16.msra.mxu0 %v258
    %289 = vmatprep.subr.bf16.mxu0 0
    %290 = vmatpush1.bf16.msra.mxu0 %v259
    %291 = vmatprep.subr.bf16.mxu0 0
    %292 = vmatpush1.bf16.msra.mxu0 %v260
    %293 = vmatprep.subr.bf16.mxu0 0
    %294 = vmatpush1.bf16.msra.mxu0 %v261
    %295 = vmatprep.subr.bf16.mxu0 0
    %296 = vmatpush1.bf16.msra.mxu0 %v262
    %297 = vmatprep.subr.bf16.mxu0 0
    %298 = vmatpush1.bf16.msra.mxu0 %v263
    %299 = vmatprep.subr.bf16.mxu0 0
    %300 = vmatpush1.bf16.msra.mxu0 %v264
    %301 = vmatprep.subr.bf16.mxu0 0
    %302 = vmatpush1.bf16.msra.mxu0 %v265
    %303 = vmatprep.subr.bf16.mxu0 0
    %304 = vmatpush1.bf16.msra.mxu0 %v266
    %305 = vmatprep.subr.bf16.mxu0 0
    %306 = vmatpush1.bf16.msra.mxu0 %v267
    %307 = vmatprep.subr.bf16.mxu0 0
    %308 = vmatpush1.bf16.msra.mxu0 0
    %309 = vmatprep.subr.bf16.mxu0 0
    %310 = vmatpush1.bf16.msra.mxu0 0
    %311 = vmatprep.subr.bf16.mxu0 0
    %312 = vmatpush1.bf16.msra.mxu0 0
    %313 = vmatprep.subr.bf16.mxu0 0
    %314 = vmatpush1.bf16.msra.mxu0 0
    %315 = vmatprep.mubr.bf16.mxu0 %v281
    %316 = vmatmul.mubr.bf16.gmra.mrb[0].mxu0 %v175
    %v317 = vpop.f32.mrb[0].mxu0
    %v318 = vadd.f32 %v206, %v317
    %v319 = vpop.f32.mrb[0].mxu0
    %v320 = vpop.f32.mrb[0].mxu0
    %v321 = vpop.f32.mrb[0].mxu0
    %322 = vdwg.mxu0
    %v323 = vpack.c.bf16 %v318, %v318
    %v324 = vld [vmem:[%s5] sm:$0xf]
    %v325 = vld [vmem:[%s5 + $0x4] sm:$0xf]
    %v326 = vld [vmem:[%s5 + $0x8] sm:$0xf]
    %v327 = vld [vmem:[%s5 + $0xc] sm:$0xf]
    %v328 = vld [vmem:[%s5 + $0x10] sm:$0xf]
    %v329 = vld [vmem:[%s5 + $0x14] sm:$0xf]
    %v330 = vld [vmem:[%s5 + $0x18] sm:$0xf]
    %v331 = vld [vmem:[%s5 + $0x1c] sm:$0xf]
    %v332 = vld [vmem:[%s5 + $0x20] sm:$0xf]
    %v333 = vld [vmem:[%s5 + $0x24] sm:$0xf]
    %v334 = vld [vmem:[%s5 + $0x28] sm:$0xf]
    %v335 = vld [vmem:[%s5 + $0x2c] sm:$0xf]
    %v336 = vld [vmem:[%s5 + $0x30] sm:$0xf]
    %v337 = vld [vmem:[%s5 + $0x34] sm:$0xf]
    %v338 = vld [vmem:[%s5 + $0x38] sm:$0xf]
    %v339 = vld [vmem:[%s5 + $0x3c] sm:$0xf]
    %v340 = vld [vmem:[%s6] sm:$0x1]
    %v342 = vlaneseq
    %v343 = vshrl.u32 %v342, 7
    %v344 = vsub.s32 0, %v343
    %v345 = vrot.slane %v340, %v344
    %v363 = vunpack.c.l.b16 %v324
    %v364 = vunpack.c.l.b16 %v325
    %v365 = vunpack.c.l.b16 %v326
    %v366 = vunpack.c.l.b16 %v327
    %v367 = vunpack.c.l.b16 %v328
    %v368 = vunpack.c.l.b16 %v329
    %v369 = vunpack.c.l.b16 %v330
    %v370 = vunpack.c.l.b16 %v331
    %v371 = vunpack.c.l.b16 %v332
    %v372 = vunpack.c.l.b16 %v333
    %v373 = vunpack.c.l.b16 %v334
    %v374 = vunpack.c.l.b16 %v335
    %v375 = vunpack.c.l.b16 %v336
    %v376 = vunpack.c.l.b16 %v337
    %v377 = vunpack.c.l.b16 %v338
    %v378 = vunpack.c.l.b16 %v339
    %v379 = vpack.c.b16 %v364, %v363
    %v380 = vpack.c.b16 %v366, %v365
    %v381 = vpack.c.b16 %v368, %v367
    %v382 = vpack.c.b16 %v370, %v369
    %v383 = vpack.c.b16 %v372, %v371
    %v384 = vpack.c.b16 %v374, %v373
    %v385 = vpack.c.b16 %v376, %v375
    %v386 = vpack.c.b16 %v378, %v377
    %395 = vmatprep.subr.bf16.mxu0 0
    %396 = vmatpush1.bf16.msra.mxu0 %v379
    %397 = vmatprep.subr.bf16.mxu0 0
    %398 = vmatpush1.bf16.msra.mxu0 %v380
    %399 = vmatprep.subr.bf16.mxu0 0
    %400 = vmatpush1.bf16.msra.mxu0 %v381
    %401 = vmatprep.subr.bf16.mxu0 0
    %402 = vmatpush1.bf16.msra.mxu0 %v382
    %403 = vmatprep.subr.bf16.mxu0 0
    %404 = vmatpush1.bf16.msra.mxu0 %v383
    %405 = vmatprep.subr.bf16.mxu0 0
    %406 = vmatpush1.bf16.msra.mxu0 %v384
    %407 = vmatprep.subr.bf16.mxu0 0
    %408 = vmatpush1.bf16.msra.mxu0 %v385
    %409 = vmatprep.subr.bf16.mxu0 0
    %410 = vmatpush1.bf16.msra.mxu0 %v386
    %411 = vmatprep.subr.bf16.mxu0 0
    %412 = vmatpush1.bf16.msra.mxu0 0
    %413 = vmatprep.subr.bf16.mxu0 0
    %414 = vmatpush1.bf16.msra.mxu0 0
    %415 = vmatprep.subr.bf16.mxu0 0
    %416 = vmatpush1.bf16.msra.mxu0 0
    %417 = vmatprep.subr.bf16.mxu0 0
    %418 = vmatpush1.bf16.msra.mxu0 0
    %419 = vmatprep.subr.bf16.mxu0 0
    %420 = vmatpush1.bf16.msra.mxu0 0
    %421 = vmatprep.subr.bf16.mxu0 0
    %422 = vmatpush1.bf16.msra.mxu0 0
    %423 = vmatprep.subr.bf16.mxu0 0
    %424 = vmatpush1.bf16.msra.mxu0 0
    %425 = vmatprep.subr.bf16.mxu0 0
    %426 = vmatpush1.bf16.msra.mxu0 0
    %427 = vmatprep.mubr.bf16.mxu0 0
    %428 = vmatmul.mubr.bf16.gmra.mrb[0].mxu0 %v323
    %v429 = vpop.f32.mrb[0].mxu0
    %v430 = vadd.f32 %v345, %v429
    %v431 = vpop.f32.mrb[0].mxu0
    %v432 = vpop.f32.mrb[0].mxu0
    %v433 = vpop.f32.mrb[0].mxu0
    %434 = vdwg.mxu0
    %v435 = vmax.f32 %v430, 0.0
    %v436 = vpack.c.bf16 %v435, %v435
    %v437 = vld [vmem:[%s7] sm:$0xf]
    %v438 = vld [vmem:[%s7 + $0x4] sm:$0xf]
    %v439 = vld [vmem:[%s7 + $0x8] sm:$0xf]
    %v440 = vld [vmem:[%s7 + $0xc] sm:$0xf]
    %v441 = vld [vmem:[%s7 + $0x10] sm:$0xf]
    %v442 = vld [vmem:[%s7 + $0x14] sm:$0xf]
    %v443 = vld [vmem:[%s7 + $0x18] sm:$0xf]
    %v444 = vld [vmem:[%s7 + $0x1c] sm:$0xf]
    %v445 = vld [vmem:[%s7 + $0x20] sm:$0xf]
    %v446 = vld [vmem:[%s7 + $0x24] sm:$0xf]
    %v447 = vld [vmem:[%s7 + $0x28] sm:$0xf]
    %v448 = vld [vmem:[%s7 + $0x2c] sm:$0xf]
    %v449 = vld [vmem:[%s7 + $0x30] sm:$0xf]
    %v450 = vld [vmem:[%s7 + $0x34] sm:$0xf]
    %v451 = vld [vmem:[%s7 + $0x38] sm:$0xf]
    %v452 = vld [vmem:[%s7 + $0x3c] sm:$0xf]
    %v453 = vld [vmem:[%s8] sm:$0x1]
    %v455 = vlaneseq
    %v456 = vshrl.u32 %v455, 7
    %v457 = vsub.s32 0, %v456
    %v458 = vrot.slane %v453, %v457
    %v476 = vunpack.c.l.b16 %v437
    %v477 = vunpack.c.l.b16 %v438
    %v478 = vunpack.c.l.b16 %v439
    %v479 = vunpack.c.l.b16 %v440
    %v480 = vunpack.c.l.b16 %v441
    %v481 = vunpack.c.l.b16 %v442
    %v482 = vunpack.c.l.b16 %v443
    %v483 = vunpack.c.l.b16 %v444
    %v484 = vunpack.c.l.b16 %v445
    %v485 = vunpack.c.l.b16 %v446
    %v486 = vunpack.c.l.b16 %v447
    %v487 = vunpack.c.l.b16 %v448
    %v488 = vunpack.c.l.b16 %v449
    %v489 = vunpack.c.l.b16 %v450
    %v490 = vunpack.c.l.b16 %v451
    %v491 = vunpack.c.l.b16 %v452
    %v492 = vpack.c.b16 %v477, %v476
    %v493 = vpack.c.b16 %v479, %v478
    %v494 = vpack.c.b16 %v481, %v480
    %v495 = vpack.c.b16 %v483, %v482
    %v496 = vpack.c.b16 %v485, %v484
    %v497 = vpack.c.b16 %v487, %v486
    %v498 = vpack.c.b16 %v489, %v488
    %v499 = vpack.c.b16 %v491, %v490
    %508 = vmatprep.subr.bf16.mxu0 0
    %509 = vmatpush1.bf16.msra.mxu0 %v492
    %510 = vmatprep.subr.bf16.mxu0 0
    %511 = vmatpush1.bf16.msra.mxu0 %v493
    %512 = vmatprep.subr.bf16.mxu0 0
    %513 = vmatpush1.bf16.msra.mxu0 %v494
    %514 = vmatprep.subr.bf16.mxu0 0
    %515 = vmatpush1.bf16.msra.mxu0 %v495
    %516 = vmatprep.subr.bf16.mxu0 0
    %517 = vmatpush1.bf16.msra.mxu0 %v496
    %518 = vmatprep.subr.bf16.mxu0 0
    %519 = vmatpush1.bf16.msra.mxu0 %v497
    %520 = vmatprep.subr.bf16.mxu0 0
    %521 = vmatpush1.bf16.msra.mxu0 %v498
    %522 = vmatprep.subr.bf16.mxu0 0
    %523 = vmatpush1.bf16.msra.mxu0 %v499
    %524 = vmatprep.subr.bf16.mxu0 0
    %525 = vmatpush1.bf16.msra.mxu0 0
    %526 = vmatprep.subr.bf16.mxu0 0
    %527 = vmatpush1.bf16.msra.mxu0 0
    %528 = vmatprep.subr.bf16.mxu0 0
    %529 = vmatpush1.bf16.msra.mxu0 0
    %530 = vmatprep.subr.bf16.mxu0 0
    %531 = vmatpush1.bf16.msra.mxu0 0
    %532 = vmatprep.subr.bf16.mxu0 0
    %533 = vmatpush1.bf16.msra.mxu0 0
    %534 = vmatprep.subr.bf16.mxu0 0
    %535 = vmatpush1.bf16.msra.mxu0 0
    %536 = vmatprep.subr.bf16.mxu0 0
    %537 = vmatpush1.bf16.msra.mxu0 0
    %538 = vmatprep.subr.bf16.mxu0 0
    %539 = vmatpush1.bf16.msra.mxu0 0
    %540 = vmatprep.mubr.bf16.mxu0 0
    %541 = vmatmul.mubr.bf16.gmra.mrb[0].mxu0 %v436
    %v542 = vpop.f32.mrb[0].mxu0
    %v543 = vadd.f32 %v458, %v542
    %v544 = vpop.f32.mrb[0].mxu0
    %v545 = vpop.f32.mrb[0].mxu0
    %v546 = vpop.f32.mrb[0].mxu0
    %547 = vdwg.mxu0
    %548 = vst [vmem:[#allocation2] sm:$0x3] %v543
    // Predicated region
    $region38: #{densecnn_forward.1} parent=1 // pred_check
      _
    $region39: #{densecnn_forward.1} parent=1 // pred_check_branch
      %550 = sbr.rel (0) target = $region41
    $region40: #{densecnn_forward.1} parent=1 // pred_region
      %s552 = ssub.s32 32, 32
      %553 = vsyncadd [#allocation3], %s552
      %s555 = sshll.u32 [#allocation2], 4
      %s556 = int_to_ptr.vmem [resolvable:$true] %s555
      %558 = dma.vmem_to_hbm [thread:$0]  %s556, 32, %s9, [#allocation3]
    $region41: #{densecnn_forward.1} parent=1 // pred_fallthru
      _
    // Predicated region
    $region42: #{densecnn_forward.1} parent=1 // pred_check
      _
    $region43: #{densecnn_forward.1} parent=1 // pred_check_branch
      %560 = sbr.rel (0) target = $region45
    $region44: #{densecnn_forward.1} parent=1 // pred_region
      %561 = dma.done [#allocation3], 32
    $region45: #{densecnn_forward.1} parent=1 // pred_fallthru
      _
    %562 = vsyncpa [#allocation3], 1

</llo_original>
